<compile_context>
chip_gen: v5e
topology: v5e:2x2
jax: 0.10.0
libtpu: 0.0.40
codegen_flags: <defaults>
</compile_context>

<pallas_src>
import functools

import jax
import jax.numpy as jnp
from jax.experimental import pallas as pl
from jax.experimental.pallas import tpu as pltpu


def _round_up(x, m):
    return (x + m - 1) // m * m


def _readout_kernel(seg_ref, seq_ref, sum_ref, cnt_ref, *, n_rows, nk_split):
    # seg_ref: (1, tk)   int32   segment id per node of this tile (-1 = pad)
    # seq_ref: (tk, D)   float32 node features (ragged tail rows may be garbage)
    # sum_ref: (ts, D)   float32 partial segment sums   (resident across k)
    # cnt_ref: (ts, 1)   float32 partial segment counts (resident across k)
    c = pl.program_id(0)
    s = pl.program_id(1)
    k = pl.program_id(2)
    ts = sum_ref.shape[0]
    tk = seg_ref.shape[1]

    @pl.when(k == 0)
    def _init():
        sum_ref[...] = jnp.zeros_like(sum_ref)
        cnt_ref[...] = jnp.zeros_like(cnt_ref)

    seg = seg_ref[...]                                        # (1, tk)
    # Fold the s-tile offset into the segment row (tk adds) instead of the
    # (ts, tk) iota (ts*tk adds).  Padded ids (-1) can never match iota >= 0.
    seg_local = seg - s * ts
    row = jax.lax.broadcasted_iota(jnp.int32, (ts, tk), 0)
    onehot = (row == seg_local).astype(jnp.float32)           # (ts, tk)

    # Ragged tail: rows beyond n_rows hold uninitialised VMEM (possibly
    # NaN/Inf); zero them so 0*garbage never reaches the MXU accumulator.
    tile_start = (c * nk_split + k) * tk
    node = jax.lax.broadcasted_iota(jnp.int32, (tk, 1), 0) + tile_start
    x = jnp.where(node < n_rows, seq_ref[...], 0.0)           # (tk, D)

    # Segment sums on the MXU; per-segment counts on the XLU (slack slot).
    sum_ref[...] += jnp.dot(onehot, x, preferred_element_type=jnp.float32)
    cnt_ref[...] += jnp.sum(onehot, axis=1, keepdims=True)


def my_readout(seq, sub_match, num_segments, *, reduce="mean",
               block_k=2048, block_s=512):
    """JAX/Pallas equivalent of MyReadout.forward(seq, sub_match, reduce='mean').

    `num_segments` is static (== torch.unique(sub_match).size(0)); segment ids
    must be contiguous 0..num_segments-1.  jit-compatible.
    """
    # TODO(synk): torch.unique(sub_match).size(0) is a data-dependent shape with
    # no Pallas equivalent; it is supplied as the static `num_segments` argument.
    assert reduce == "mean", "only reduce='mean' (the module default) is implemented"
    seq = jnp.asarray(seq, jnp.float32)
    sub_match = jnp.asarray(sub_match, jnp.int32)
    N, D = seq.shape

    # ---- tiling ---------------------------------------------------------------
    d_lane = _round_up(D, 128)                  # internal VMEM lane padding (accounting only)
    # Node (reduction) tile: multiple of 128, capped so a double-buffered seq
    # tile stays <= ~4 MiB even for wide D.
    max_tk = max(128, ((4 * 1024 * 1024) // (4 * d_lane)) // 128 * 128)
    tk = max(128, min(_round_up(block_k, 128), _round_up(N, 128), max_tk))
    nk_total = -(-N // tk)

    ts = min(_round_up(block_s, 8), _round_up(num_segments, 8))
    s_pad = _round_up(num_segments, ts)
    s_tiles = s_pad // ts

    # v7x: with a single segment tile, split the reduction over a leading
    # "core" axis so both TensorCores get work; partials are combined below.
    split = 2 if (s_tiles == 1 and nk_total >= 2) else 1
    nk_split = -(-nk_total // split)
    n_total = split * nk_split * tk

    # ---- operands -------------------------------------------------------------
    # Only the tiny segment row is padded in HBM (-1 matches nothing); seq is
    # streamed directly from HBM with no padded copy.
    seg_row = jnp.full((1, n_total), -1, jnp.int32).at[0, :N].set(sub_match)

    def seg_map(c, s, k):
        return (0, c * nk_split + k)

    def seq_map(c, s, k):
        # Clamp so a fully-out-of-range tile (odd nk_total under the core
        # split) never issues an OOB DMA; its data is masked in-kernel anyway.
        return (jnp.minimum(c * nk_split + k, nk_total - 1), 0)

    # ---- VMEM budget (bytes): lane-padded tiles, double buffering, onehot -----
    vmem_bytes = 4 * (
        2 * tk * d_lane      # double-buffered seq tile
        + 2 * 8 * tk         # double-buffered (1, tk) int32 segment row
        + 2 * ts * d_lane    # resident sums block (+ writeback buffer)
        + 2 * ts * 128       # resident counts block
        + ts * tk            # onehot intermediate
        + tk * d_lane        # masked seq copy
    )
    vmem_limit = int(min(max(2 * vmem_bytes, 16 * 1024 * 1024), 56 * 1024 * 1024))

    sums, counts = pl.pallas_call(
        functools.partial(_readout_kernel, n_rows=N, nk_split=nk_split),
        out_shape=(
            jax.ShapeDtypeStruct((split, s_pad, D), jnp.float32),
            jax.ShapeDtypeStruct((split, s_pad, 1), jnp.float32),
        ),
        grid=(split, s_tiles, nk_split),
        in_specs=[
            pl.BlockSpec((1, tk), seg_map),
            pl.BlockSpec((tk, D), seq_map),   # full-width feature dim: no 128-padding of the stream
        ],
        out_specs=(
            pl.BlockSpec((None, ts, D), lambda c, s, k: (c, s, 0)),
            pl.BlockSpec((None, ts, 1), lambda c, s, k: (c, s, 0)),
        ),
        compiler_params=pltpu.CompilerParams(
            dimension_semantics=("parallel", "parallel", "arbitrary"),
            vmem_limit_bytes=vmem_limit,
        ),
    )(seg_row, seq)

    # Combine per-core partials (tiny) and apply the scatter_reduce_ 'mean'
    # with include_self=True on a zero-initialised output: divide by count+1.
    sums = jnp.sum(sums, axis=0)
    counts = jnp.sum(counts, axis=0)
    return sums[:num_segments] / (counts[:num_segments] + 1.0)


def _reference(seq, sub_match, num_segments):
    # Pure-JAX reference of scatter_reduce_('mean', include_self=True).
    seq = jnp.asarray(seq, jnp.float32)
    sub_match = jnp.asarray(sub_match, jnp.int32)
    D = seq.shape[1]
    sums = jnp.zeros((num_segments, D), jnp.float32).at[sub_match].add(seq)
    counts = jnp.zeros((num_segments,), jnp.float32).at[sub_match].add(1.0)
    return sums / (counts + 1.0)[:, None]


if __name__ == "__main__":
    key = jax.random.PRNGKey(0)
    k1, k2, k3, k4 = jax.random.split(key, 4)

    # 1) Small shapes consistent with the module: 8 nodes, 32 features, 4 graphs.
    N, D, S = 8, 32, 4
    seq = jax.random.normal(k1, (N, D), dtype=jnp.float32)
    sub_match = jnp.array([0, 0, 1, 1, 2, 2, 3, 3], dtype=jnp.int32)
    out = jax.block_until_ready(my_readout(seq, sub_match, S))
    ref = _reference(seq, sub_match, S)
    assert out.shape == (S, D)
    assert jnp.allclose(out, ref, atol=2e-5, rtol=1e-5), "mismatch (small)"

    # 2) Multi-k-tile + core-split path (ragged tail, clamped OOB tile).
    N2, D2, S2 = 5000, 32, 5
    seq2 = jax.random.normal(k2, (N2, D2), dtype=jnp.float32)
    sub_match2 = jax.random.permutation(k3, jnp.arange(N2, dtype=jnp.int32) % S2)
    out2 = jax.block_until_ready(my_readout(seq2, sub_match2, S2, block_k=2048))
    ref2 = _reference(seq2, sub_match2, S2)
    assert out2.shape == (S2, D2)
    assert jnp.allclose(out2, ref2, atol=2e-5, rtol=1e-5), "mismatch (split path)"

    # 3) Multi s-tile x multi k-tile, ragged N, non-128 feature width.
    N3, D3, S3 = 700, 48, 20
    seq3 = jax.random.normal(k4, (N3, D3), dtype=jnp.float32)
    sub_match3 = (jnp.arange(N3, dtype=jnp.int32) * 7) % S3
    out3 = jax.block_until_ready(
        my_readout(seq3, sub_match3, S3, block_k=256, block_s=8))
    ref3 = _reference(seq3, sub_match3, S3)
    assert out3.shape == (S3, D3)
    assert jnp.allclose(out3, ref3, atol=2e-5, rtol=1e-5), "mismatch (multi-tile)"

    print("KERNEL_OK")
</pallas_src>

<mosaic_0001>
module attributes {stable_mosaic.version = 11 : i64} {
  func.func @_readout_kernel(%arg0: i32, %arg1: i32, %arg2: i32, %arg3: memref<1x128xi32, #tpu.memory_space<vmem>>, %arg4: memref<128x32xf32, #tpu.memory_space<vmem>>, %arg5: memref<1x8x32xf32, #tpu.memory_space<vmem>>, %arg6: memref<1x8x1xf32, #tpu.memory_space<vmem>>) attributes {dimension_semantics = [#tpu.dimension_semantics<parallel>, #tpu.dimension_semantics<parallel>, #tpu.dimension_semantics<arbitrary>], iteration_bounds = array<i64: 1, 1, 1>, scalar_prefetch = 0 : i64, scratch_operands = 0 : i64, tpu.core_type = #tpu.core_type<tc>, window_params = [{transform_indices = @transform_0, window_bounds = array<i64: 1, 128>}, {transform_indices = @transform_1, window_bounds = array<i64: 128, 32>}, {transform_indices = @transform_2, window_bounds = array<i64: 1, 8, 32>}, {transform_indices = @transform_3, window_bounds = array<i64: 1, 8, 1>}]} {
    %c0_i32 = arith.constant 0 : i32
    %0 = arith.cmpi eq, %arg2, %c0_i32 : i32
    %1 = arith.extui %0 : i1 to i32
    %c0_i32_0 = arith.constant 0 : i32
    %2 = arith.cmpi ne, %1, %c0_i32_0 : i32
    scf.if %2 {
      %cst_19 = arith.constant 0.000000e+00 : f32
      %40 = vector.broadcast %cst_19 : f32 to vector<8x32xf32>
      %c0_20 = arith.constant 0 : index
      %c0_21 = arith.constant 0 : index
      %c0_22 = arith.constant 0 : index
      %41 = vector.load %arg5[%c0_20, %c0_21, %c0_22] : memref<1x8x32xf32, #tpu.memory_space<vmem>>, vector<1x8x32xf32>
      %42 = vector.shape_cast %41 : vector<1x8x32xf32> to vector<8x32xf32>
      %43 = vector.shape_cast %40 : vector<8x32xf32> to vector<1x8x32xf32>
      tpu.vector_store %arg5[%c0_20, %c0_21, %c0_22], %43 {strides = array<i32>} : memref<1x8x32xf32, #tpu.memory_space<vmem>>, vector<1x8x32xf32>,
      %cst_23 = arith.constant 0.000000e+00 : f32
      %44 = vector.broadcast %cst_23 : f32 to vector<8x1xf32>
      %c0_24 = arith.constant 0 : index
      %c0_25 = arith.constant 0 : index
      %c0_26 = arith.constant 0 : index
      %45 = vector.load %arg6[%c0_24, %c0_25, %c0_26] : memref<1x8x1xf32, #tpu.memory_space<vmem>>, vector<1x8x1xf32>
      %46 = vector.shape_cast %45 : vector<1x8x1xf32> to vector<8x1xf32>
      %47 = vector.shape_cast %44 : vector<8x1xf32> to vector<1x8x1xf32>
      tpu.vector_store %arg6[%c0_24, %c0_25, %c0_26], %47 {strides = array<i32>} : memref<1x8x1xf32, #tpu.memory_space<vmem>>, vector<1x8x1xf32>,
    } else {
    }
    %c0 = arith.constant 0 : index
    %c0_1 = arith.constant 0 : index
    %3 = vector.load %arg3[%c0, %c0_1] : memref<1x128xi32, #tpu.memory_space<vmem>>, vector<1x128xi32>
    %c8_i32 = arith.constant 8 : i32
    %4 = arith.muli %arg1, %c8_i32 : i32
    %5 = vector.broadcast %4 : i32 to vector<1x128xi32>
    %6 = arith.subi %3, %5 : vector<1x128xi32>
    %7 = tpu.iota {dimensions = array<i32: 0>} : vector<8x128xi32>
    %8 = vector.broadcast %6 : vector<1x128xi32> to vector<8x128xi32>
    %9 = arith.cmpi eq, %7, %8 : vector<8x128xi32>
    %10 = arith.extui %9 : vector<8x128xi1> to vector<8x128xi32>
    %11 = arith.sitofp %10 : vector<8x128xi32> to vector<8x128xf32>
    %c1_i32 = arith.constant 1 : i32
    %12 = arith.muli %arg0, %c1_i32 : i32
    %13 = arith.addi %12, %arg2 : i32
    %c128_i32 = arith.constant 128 : i32
    %14 = arith.muli %13, %c128_i32 : i32
    %15 = tpu.iota {dimensions = array<i32: 0>} : vector<128x1xi32>
    %16 = vector.broadcast %14 : i32 to vector<128x1xi32>
    %17 = arith.addi %15, %16 : vector<128x1xi32>
    %c8_i32_2 = arith.constant 8 : i32
    %18 = vector.broadcast %c8_i32_2 : i32 to vector<128x1xi32>
    %19 = arith.cmpi slt, %17, %18 : vector<128x1xi32>
    %c0_3 = arith.constant 0 : index
    %c0_4 = arith.constant 0 : index
    %20 = vector.load %arg4[%c0_3, %c0_4] : memref<128x32xf32, #tpu.memory_space<vmem>>, vector<128x32xf32>
    %cst = arith.constant 0.000000e+00 : f32
    %21 = vector.shape_cast %19 : vector<128x1xi1> to vector<128x1xi1>
    %22 = vector.broadcast %21 : vector<128x1xi1> to vector<128x32xi1>
    %23 = vector.broadcast %cst : f32 to vector<128x32xf32>
    %24 = arith.select %22, %20, %23 : vector<128x32xi1>, vector<128x32xf32>
    %c0_5 = arith.constant 0 : index
    %c0_6 = arith.constant 0 : index
    %c0_7 = arith.constant 0 : index
    %25 = vector.load %arg5[%c0_5, %c0_6, %c0_7] : memref<1x8x32xf32, #tpu.memory_space<vmem>>, vector<1x8x32xf32>
    %26 = vector.shape_cast %25 : vector<1x8x32xf32> to vector<8x32xf32>
    %cst_8 = arith.constant dense<0.000000e+00> : vector<8x32xf32>
    %27 = tpu.matmul %11, %24, %cst_8 {dimension_numbers = #tpu.dot_dimension_numbers<[1], [0], [0], [1], [0, 0, 1, 1], [], []>} : vector<8x128xf32>, vector<128x32xf32>, vector<8x32xf32> -> vector<8x32xf32>
    %28 = arith.addf %26, %27 : vector<8x32xf32>
    %c0_9 = arith.constant 0 : index
    %c0_10 = arith.constant 0 : index
    %c0_11 = arith.constant 0 : index
    %29 = vector.load %arg5[%c0_9, %c0_10, %c0_11] : memref<1x8x32xf32, #tpu.memory_space<vmem>>, vector<1x8x32xf32>
    %30 = vector.shape_cast %29 : vector<1x8x32xf32> to vector<8x32xf32>
    %31 = vector.shape_cast %28 : vector<8x32xf32> to vector<1x8x32xf32>
    tpu.vector_store %arg5[%c0_9, %c0_10, %c0_11], %31 {strides = array<i32>} : memref<1x8x32xf32, #tpu.memory_space<vmem>>, vector<1x8x32xf32>,
    %c0_12 = arith.constant 0 : index
    %c0_13 = arith.constant 0 : index
    %c0_14 = arith.constant 0 : index
    %32 = vector.load %arg6[%c0_12, %c0_13, %c0_14] : memref<1x8x1xf32, #tpu.memory_space<vmem>>, vector<1x8x1xf32>
    %33 = vector.shape_cast %32 : vector<1x8x1xf32> to vector<8x1xf32>
    %cst_15 = arith.constant dense<0.000000e+00> : vector<8xf32>
    %34 = vector.multi_reduction <add>, %11, %cst_15 [1] : vector<8x128xf32> to vector<8xf32>
    %35 = vector.shape_cast %34 : vector<8xf32> to vector<8x1xf32>
    %36 = arith.addf %33, %35 : vector<8x1xf32>
    %c0_16 = arith.constant 0 : index
    %c0_17 = arith.constant 0 : index
    %c0_18 = arith.constant 0 : index
    %37 = vector.load %arg6[%c0_16, %c0_17, %c0_18] : memref<1x8x1xf32, #tpu.memory_space<vmem>>, vector<1x8x1xf32>
    %38 = vector.shape_cast %37 : vector<1x8x1xf32> to vector<8x1xf32>
    %39 = vector.shape_cast %36 : vector<8x1xf32> to vector<1x8x1xf32>
    tpu.vector_store %arg6[%c0_16, %c0_17, %c0_18], %39 {strides = array<i32>} : memref<1x8x1xf32, #tpu.memory_space<vmem>>, vector<1x8x1xf32>,
    return
  }
  func.func @transform_0(%arg0: i32, %arg1: i32, %arg2: i32) -> (i32, i32) {
    %c1_i32 = arith.constant 1 : i32
    %0 = arith.muli %arg0, %c1_i32 : i32
    %1 = arith.addi %0, %arg2 : i32
    %c0_i32 = arith.constant 0 : i32
    %c0_i32_0 = arith.constant 0 : i32
    return %c0_i32, %1 : i32, i32
  }
  func.func @transform_1(%arg0: i32, %arg1: i32, %arg2: i32) -> (i32, i32) {
    %c1_i32 = arith.constant 1 : i32
    %0 = arith.muli %arg0, %c1_i32 : i32
    %1 = arith.addi %0, %arg2 : i32
    %c0_i32 = arith.constant 0 : i32
    %2 = arith.minsi %1, %c0_i32 : i32
    %c0_i32_0 = arith.constant 0 : i32
    %c0_i32_1 = arith.constant 0 : i32
    return %2, %c0_i32_0 : i32, i32
  }
  func.func @transform_2(%arg0: i32, %arg1: i32, %arg2: i32) -> (i32, i32, i32) {
    %c0_i32 = arith.constant 0 : i32
    %c0_i32_0 = arith.constant 0 : i32
    return %arg0, %arg1, %c0_i32 : i32, i32, i32
  }
  func.func @transform_3(%arg0: i32, %arg1: i32, %arg2: i32) -> (i32, i32, i32) {
    %c0_i32 = arith.constant 0 : i32
    %c0_i32_0 = arith.constant 0 : i32
    return %arg0, %arg1, %c0_i32 : i32, i32, i32
  }
}

</mosaic_0001>

<llo_original>
// kernel: tpu_custom_call.1
$region0: #{tpu_custom_call.1}
  #allocation0 [shape = 'u32[]', space=smem, size = 0x4, offset = 0x4, fixed_abs, tag = 'smem constant byte address 0x4 - core index']
  #allocation1 [shape = 'u32[72,128]{1,0:T(1,128)}', space=vmem, size = 0x9000, scoped, tag = 'internal scratch']
  %s0 = inlined_call_operand.hbm [shape: s32[1,128], index: 0, kind: input, shape index: {}]
  %s1 = inlined_call_operand.hbm [shape: f32[8,32], index: 1, kind: input, shape index: {}]
  %s2 = inlined_call_operand.hbm [shape: f32[1,8,32], index: 2, kind: output, shape index: {0}]
  %s3 = inlined_call_operand.vmem [shape: f32[1,8,1], index: 3, kind: output, shape index: {1}]
  %4 = xla_tuple %s2, %s3
  %s5 = sld [smem:[#allocation0]]
  $region38: #{tpu_custom_call.1} parent=0
    _
  %s7 = ssub.s32 1, %s5
  %s8 = scalar_select 0, %s7, %s5
  $region1: #{tpu_custom_call.1} parent=0
    #allocation2 [shape = 'u8[512]{0}', space=vmem, size = 0x400, scoped, tag = 'input window, operand 0, single buffered']
    #allocation3 [shape = 's32[1]{0}', space=sflag, size = 0x4, scoped, tag = 'scoped memory for tpu_custom_call.1']
    #allocation4 [shape = 's32[1]{0}', space=sflag, size = 0x4, scoped, tag = 'scoped memory for tpu_custom_call.1']
    #allocation5 [shape = 'u8[65536]{0}', space=vmem, size = 0x10000, scoped, tag = 'input window, operand 1, single buffered']
    #allocation6 [shape = 's32[1]{0}', space=sflag, size = 0x4, scoped, tag = 'scoped memory for tpu_custom_call.1']
    #allocation7 [shape = 'u8[4096]{0}', space=vmem, size = 0x1000, scoped, tag = 'output window, operand 0, single buffered']
    %9 = vsyncpa [#allocation3], 0
    %10 = vsyncpa [#allocation6], 0
    %11 = vsyncpa [#allocation4], 0
    // Predicated region
    $region2: #{tpu_custom_call.1} parent=1 // pred_check
      _
    $region3: #{tpu_custom_call.1} parent=1 // pred_check_branch
      %13 = sbr.rel (0) target = $region5
    $region4: #{tpu_custom_call.1} parent=1 // pred_region
      %s14 = sadd.s32 0, 0
      %16 = vsyncadd [#allocation3], 0
      %s17 = scalar_lea.hbm %s0, %s14
      %s19 = sshll.u32 %s17, 4
      %s20 = int_to_ptr.hbm [resolvable:$true] %s19
      %s21 = sshll.u32 [#allocation2], 4
      %s22 = int_to_ptr.vmem [resolvable:$true] %s21
      %24 = dma.hbm_to_vmem [thread:$0]  %s20, 16, %s22, [#allocation3]
    $region5: #{tpu_custom_call.1} parent=1 // pred_fallthru
      _
    // Predicated region
    $region6: #{tpu_custom_call.1} parent=1 // pred_check
      _
    $region7: #{tpu_custom_call.1} parent=1 // pred_check_branch
      %26 = sbr.rel (0) target = $region9
    $region8: #{tpu_custom_call.1} parent=1 // pred_region
      %s27 = sadd.s32 0, 0
      %p28 = scmp.lt.s32.totalorder %s27, 0
      %s29 = scalar_select %p28, %s27, 0
      %s30 = smul.u32 16, %s29
      %s31 = ssub.s32 1, %s30
      %s32 = smul.u32 8, %s31
      %s33 = ssub.s32 128, %s32
      %s34 = sshll.u32 %s33, 4
      %35 = vsyncadd [#allocation6], %s34
      %p36 = scmp.ne.s32.totalorder 0, %s32
      %s37 = smul.addr %s30, 8
      %s38 = scalar_lea.hbm %s1, %s37
      %s39 = smul.u32 8, %s31
      %s40 = sshll.u32 %s38, 4
      %s41 = int_to_ptr.hbm [resolvable:$true] %s40
      %s42 = sshll.u32 [#allocation5], 4
      %s43 = int_to_ptr.vmem [resolvable:$true] %s42
      %s44 = sshll.u32 %s39, 4
      %48 = dma.hbm_to_vmem [thread:$0]  (%p36), %s41, %s44, %s43, [#allocation6], 128, 128, 8
    $region9: #{tpu_custom_call.1} parent=1 // pred_fallthru
      _
    // Predicated region
    $region10: #{tpu_custom_call.1} parent=1 // pred_check
      _
    $region11: #{tpu_custom_call.1} parent=1 // pred_check_branch
      %50 = sbr.rel (0) target = $region13
    $region12: #{tpu_custom_call.1} parent=1 // pred_region
      %52 = dma.done [#allocation3], 16
    $region13: #{tpu_custom_call.1} parent=1 // pred_fallthru
      _
    // Predicated region
    $region14: #{tpu_custom_call.1} parent=1 // pred_check
      _
    $region15: #{tpu_custom_call.1} parent=1 // pred_check_branch
      %54 = sbr.rel (0) target = $region17
    $region16: #{tpu_custom_call.1} parent=1 // pred_region
      %56 = dma.done [#allocation6], 2048
    $region17: #{tpu_custom_call.1} parent=1 // pred_fallthru
      _
    %s57 = sadd.s32 0, 0
    %s58 = sadd.s32 0, 0
    %p59 = scmp.lt.s32.totalorder %s58, 0
    %s60 = scalar_select %p59, %s58, 0
    %s61 = smul.u32 16, %s60
    %s62 = ssub.s32 1, %s61
    %s63 = smul.u32 8, %s62
    %p64 = scmp.eq.s32.totalorder 0, 0
    // Predicated region
    $region18: #{tpu_custom_call.1} parent=1 // pred_check
      %p65 = pneg %p64
    $region19: #{tpu_custom_call.1} parent=1 // pred_check_branch
      %67 = sbr.rel (%p65) target = $region21
    $region20: #{tpu_custom_call.1} parent=1 // pred_region
      %vm68 = vcmask 261120
      %69 = vst.msk [vmem:[#allocation7] sm:$0xff] %vm68, 0.0
      %vm70 = vcmask 7168
      %71 = vst.msk [vmem:[%s3] sm:$0xff] %vm70, 0.0
    $region21: #{tpu_custom_call.1} parent=1 // pred_fallthru
      _
    %v72 = vld [vmem:[#allocation2] sm:$0x1]
    %s73 = smul.u32 0, 8
    %v74 = vstv %s73
    %v75 = vsub.s32 %v72, %v74
    %v76 = vlaneseq
    %v77 = vshrl.u32 %v76, 7
    %v78 = vperm.slane %v75, 0
    %vm79 = vcmp.eq.s32.totalorder %v77, %v78
    %v80 = vsel %vm79, 1, 0
    %v81 = vcvt.s32.f32 %v80
    %s82 = sadd.s32 0, 0
    %s83 = smul.u32 %s82, 128
    %v84 = vadd.s32 %v77, 8
    %v85 = vadd.s32 %v77, 16
    %v86 = vadd.s32 %v77, 24
    %v87 = vadd.s32 %v77, 32
    %v88 = vadd.s32 %v77, 40
    %v89 = vadd.s32 %v77, 48
    %v90 = vadd.s32 %v77, 56
    %v91 = vadd.s32 %v77, 64
    %v92 = vadd.s32 %v77, 72
    %v93 = vadd.s32 %v77, 80
    %v94 = vadd.s32 %v77, 88
    %v95 = vadd.s32 %v77, 96
    %v96 = vadd.s32 %v77, 104
    %v97 = vadd.s32 %v77, 112
    %v98 = vadd.s32 %v77, 120
    %v99 = vstv %s83
    %v100 = vadd.s32 %v77, %v99
    %v101 = vadd.s32 %v84, %v99
    %v102 = vadd.s32 %v85, %v99
    %v103 = vadd.s32 %v86, %v99
    %v104 = vadd.s32 %v87, %v99
    %v105 = vadd.s32 %v88, %v99
    %v106 = vadd.s32 %v89, %v99
    %v107 = vadd.s32 %v90, %v99
    %v108 = vadd.s32 %v91, %v99
    %v109 = vadd.s32 %v92, %v99
    %v110 = vadd.s32 %v93, %v99
    %v111 = vadd.s32 %v94, %v99
    %v112 = vadd.s32 %v95, %v99
    %v113 = vadd.s32 %v96, %v99
    %v114 = vadd.s32 %v97, %v99
    %v115 = vadd.s32 %v98, %v99
    %vm116 = vcmp.lt.s32.totalorder %v100, 8
    %vm117 = vcmp.lt.s32.totalorder %v101, 8
    %vm118 = vcmp.lt.s32.totalorder %v102, 8
    %vm119 = vcmp.lt.s32.totalorder %v103, 8
    %vm120 = vcmp.lt.s32.totalorder %v104, 8
    %vm121 = vcmp.lt.s32.totalorder %v105, 8
    %vm122 = vcmp.lt.s32.totalorder %v106, 8
    %vm123 = vcmp.lt.s32.totalorder %v107, 8
    %vm124 = vcmp.lt.s32.totalorder %v108, 8
    %vm125 = vcmp.lt.s32.totalorder %v109, 8
    %vm126 = vcmp.lt.s32.totalorder %v110, 8
    %vm127 = vcmp.lt.s32.totalorder %v111, 8
    %vm128 = vcmp.lt.s32.totalorder %v112, 8
    %vm129 = vcmp.lt.s32.totalorder %v113, 8
    %vm130 = vcmp.lt.s32.totalorder %v114, 8
    %vm131 = vcmp.lt.s32.totalorder %v115, 8
    %v132 = vld [vmem:[#allocation5] sm:$0xff]
    %v133 = vld [vmem:[#allocation5 + $0x8] sm:$0xff]
    %v134 = vld [vmem:[#allocation5 + $0x10] sm:$0xff]
    %v135 = vld [vmem:[#allocation5 + $0x18] sm:$0xff]
    %v136 = vld [vmem:[#allocation5 + $0x20] sm:$0xff]
    %v137 = vld [vmem:[#allocation5 + $0x28] sm:$0xff]
    %v138 = vld [vmem:[#allocation5 + $0x30] sm:$0xff]
    %v139 = vld [vmem:[#allocation5 + $0x38] sm:$0xff]
    %v140 = vld [vmem:[#allocation5 + $0x40] sm:$0xff]
    %v141 = vld [vmem:[#allocation5 + $0x48] sm:$0xff]
    %v142 = vld [vmem:[#allocation5 + $0x50] sm:$0xff]
    %v143 = vld [vmem:[#allocation5 + $0x58] sm:$0xff]
    %v144 = vld [vmem:[#allocation5 + $0x60] sm:$0xff]
    %v145 = vld [vmem:[#allocation5 + $0x68] sm:$0xff]
    %v146 = vld [vmem:[#allocation5 + $0x70] sm:$0xff]
    %v147 = vld [vmem:[#allocation5 + $0x78] sm:$0xff]
    %v148 = vsel %vm116, 1, 0
    %v149 = vsel %vm117, 1, 0
    %v150 = vsel %vm118, 1, 0
    %v151 = vsel %vm119, 1, 0
    %v152 = vsel %vm120, 1, 0
    %v153 = vsel %vm121, 1, 0
    %v154 = vsel %vm122, 1, 0
    %v155 = vsel %vm123, 1, 0
    %v156 = vsel %vm124, 1, 0
    %v157 = vsel %vm125, 1, 0
    %v158 = vsel %vm126, 1, 0
    %v159 = vsel %vm127, 1, 0
    %v160 = vsel %vm128, 1, 0
    %v161 = vsel %vm129, 1, 0
    %v162 = vsel %vm130, 1, 0
    %v163 = vsel %vm131, 1, 0
    %vm164 = vcmp.eq.s32.totalorder %v148, 1
    %vm165 = vcmp.eq.s32.totalorder %v149, 1
    %vm166 = vcmp.eq.s32.totalorder %v150, 1
    %vm167 = vcmp.eq.s32.totalorder %v151, 1
    %vm168 = vcmp.eq.s32.totalorder %v152, 1
    %vm169 = vcmp.eq.s32.totalorder %v153, 1
    %vm170 = vcmp.eq.s32.totalorder %v154, 1
    %vm171 = vcmp.eq.s32.totalorder %v155, 1
    %vm172 = vcmp.eq.s32.totalorder %v156, 1
    %vm173 = vcmp.eq.s32.totalorder %v157, 1
    %vm174 = vcmp.eq.s32.totalorder %v158, 1
    %vm175 = vcmp.eq.s32.totalorder %v159, 1
    %vm176 = vcmp.eq.s32.totalorder %v160, 1
    %vm177 = vcmp.eq.s32.totalorder %v161, 1
    %vm178 = vcmp.eq.s32.totalorder %v162, 1
    %vm179 = vcmp.eq.s32.totalorder %v163, 1
    %v180 = vsel %vm164, %v132, 0.0
    %v181 = vsel %vm165, %v133, 0.0
    %v182 = vsel %vm166, %v134, 0.0
    %v183 = vsel %vm167, %v135, 0.0
    %v184 = vsel %vm168, %v136, 0.0
    %v185 = vsel %vm169, %v137, 0.0
    %v186 = vsel %vm170, %v138, 0.0
    %v187 = vsel %vm171, %v139, 0.0
    %v188 = vsel %vm172, %v140, 0.0
    %v189 = vsel %vm173, %v141, 0.0
    %v190 = vsel %vm174, %v142, 0.0
    %v191 = vsel %vm175, %v143, 0.0
    %v192 = vsel %vm176, %v144, 0.0
    %v193 = vsel %vm177, %v145, 0.0
    %v194 = vsel %vm178, %v146, 0.0
    %v195 = vsel %vm179, %v147, 0.0
    %v196 = vld [vmem:[#allocation7] sm:$0xff]
    %197 = vmatpush.msra.mxu0 %v195
    %198 = vmatpush.msra.mxu0 %v194
    %199 = vmatpush.msra.mxu0 %v193
    %200 = vmatpush.msra.mxu0 %v192
    %201 = vmatpush.msra.mxu0 %v191
    %202 = vmatpush.msra.mxu0 %v190
    %203 = vmatpush.msra.mxu0 %v189
    %204 = vmatpush.msra.mxu0 %v188
    %205 = vmatpush.msra.mxu0 %v187
    %206 = vmatpush.msra.mxu0 %v186
    %207 = vmatpush.msra.mxu0 %v185
    %208 = vmatpush.msra.mxu0 %v184
    %209 = vmatpush.msra.mxu0 %v183
    %210 = vmatpush.msra.mxu0 %v182
    %211 = vmatpush.msra.mxu0 %v181
    %212 = vmatpush.msra.mxu0 %v180
    %213 = vmatmul.f32.gmra.mxu0 %v81
    %v214 = vpop.f32.mrf.mxu0
    %v215 = vadd.f32 0.0, %v214
    %216 = vdwg.mxu0
    %v217 = vadd.f32 %v196, %v215
    %vm218 = vcmask 261120
    %219 = vst.msk [vmem:[#allocation7] sm:$0xff] %vm218, %v217
    %v220 = vld [vmem:[%s3] sm:$0xff]
    %221 = vadd.xlane.f32.xlu0 %v81
    %v222 = vpop.xlane.xlu0 %221
    %v223 = vadd.f32 %v220, %v222
    %vm224 = vcmask 7168
    %225 = vst.msk [vmem:[%s3] sm:$0xff] %vm224, %v223
    // Predicated region
    $region22: #{tpu_custom_call.1} parent=1 // pred_check
      _
    $region23: #{tpu_custom_call.1} parent=1 // pred_check_branch
      %227 = sbr.rel (0) target = $region25
    $region24: #{tpu_custom_call.1} parent=1 // pred_region
      %229 = vsyncadd [#allocation4], 0
      %s231 = sshll.u32 [#allocation7], 4
      %s232 = int_to_ptr.vmem [resolvable:$true] %s231
      %s233 = sshll.u32 %s2, 4
      %s234 = int_to_ptr.hbm [resolvable:$true] %s233
      %236 = dma.vmem_to_hbm [thread:$0]  %s232, 128, %s234, [#allocation4]
    $region25: #{tpu_custom_call.1} parent=1 // pred_fallthru
      _
    // Predicated region
    $region26: #{tpu_custom_call.1} parent=1 // pred_check
      _
    $region27: #{tpu_custom_call.1} parent=1 // pred_check_branch
      %238 = sbr.rel (0) target = $region29
    $region28: #{tpu_custom_call.1} parent=1 // pred_region
      _
    $region29: #{tpu_custom_call.1} parent=1 // pred_fallthru
      _
    // Predicated region
    $region30: #{tpu_custom_call.1} parent=1 // pred_check
      _
    $region31: #{tpu_custom_call.1} parent=1 // pred_check_branch
      %240 = sbr.rel (0) target = $region33
    $region32: #{tpu_custom_call.1} parent=1 // pred_region
      %242 = dma.done [#allocation4], 128
    $region33: #{tpu_custom_call.1} parent=1 // pred_fallthru
      _
    // Predicated region
    $region34: #{tpu_custom_call.1} parent=1 // pred_check
      _
    $region35: #{tpu_custom_call.1} parent=1 // pred_check_branch
      %244 = sbr.rel (0) target = $region37
    $region36: #{tpu_custom_call.1} parent=1 // pred_region
      _
    $region37: #{tpu_custom_call.1} parent=1 // pred_fallthru
      _
    %245 = vsyncpa [#allocation3], 1
    %246 = vsyncpa [#allocation6], 1
    %247 = vsyncpa [#allocation4], 1

</llo_original>
